<compile_context>
chip_gen: v5e
topology: v5e:2x2
jax: 0.10.0
libtpu: 0.0.40
codegen_flags: <defaults>
</compile_context>

<pallas_src>
import jax
import jax.numpy as jnp
from jax.experimental import pallas as pl
from jax.experimental.pallas import tpu as pltpu

HIDDEN = 64   # hidden width of the PyTorch module (nn.Linear(state, 64) -> 64 -> action)
PAD = 128     # hidden feature dims padded to one full vreg lane width


def _round_up(n, m):
    return ((n + m - 1) // m) * m


def _mlp_kernel(x_ref, w1_ref, w2_ref, w3_ref, b_ref, o_ref):
    # Fused Linear->ReLU->Linear->ReLU->Linear on one batch tile.
    # Weights/biases are VMEM-resident across the batch grid (constant index_maps).
    # Dot operands are cast to the weight dtype (bf16 on v5e/v6e/v7x MXU native rate);
    # accumulation and all elementwise math (bias add, ReLU) stay f32 (v5e VPU has no bf16).
    out_pad = o_ref.shape[-1]
    cdt = w1_ref.dtype
    x = x_ref[...].astype(cdt)
    h = jnp.dot(x, w1_ref[...], preferred_element_type=jnp.float32) + b_ref[0:1, :]
    h = jnp.maximum(h, 0.0)
    h = jnp.dot(h.astype(cdt), w2_ref[...], preferred_element_type=jnp.float32) + b_ref[1:2, :]
    h = jnp.maximum(h, 0.0)
    out = (jnp.dot(h.astype(cdt), w3_ref[...], preferred_element_type=jnp.float32)
           + b_ref[2:3, 0:out_pad])
    o_ref[...] = out.astype(o_ref.dtype)   # narrow (TB, OUT_PAD) contiguous store


def pack_params(params, state_size, action_size, dtype=jnp.bfloat16):
    """Pad hidden dims to 128 lanes, pad the output dim only to round_up(action, 8),
    and pack the 3 biases into one (3, 128) f32 array.

    Zero padding preserves semantics: padded hidden columns stay 0 through ReLU and
    padded output columns are sliced off in the wrapper. dtype controls the MXU operand
    dtype (bf16 default = native MXU rate on all generations; pass jnp.float32 for an
    exact-f32 path)."""
    out_pad = _round_up(action_size, 8)
    w1 = jnp.zeros((state_size, PAD), dtype).at[:, :HIDDEN].set(params["w1"].astype(dtype))
    w2 = jnp.zeros((PAD, PAD), dtype).at[:HIDDEN, :HIDDEN].set(params["w2"].astype(dtype))
    w3 = jnp.zeros((PAD, out_pad), dtype).at[:HIDDEN, :action_size].set(params["w3"].astype(dtype))
    b = jnp.zeros((3, PAD), jnp.float32)
    b = b.at[0, :HIDDEN].set(params["b1"].reshape(-1))
    b = b.at[1, :HIDDEN].set(params["b2"].reshape(-1))
    b = b.at[2, :action_size].set(params["b3"].reshape(-1))
    return dict(w1=w1, w2=w2, w3=w3, b=b, action_size=action_size, out_pad=out_pad)


def mlp_forward(x, packed, *, tb=4096):
    """x: (B, state_size) f32. packed: output of pack_params(). Returns (B, action_size) f32."""
    w1, w2, w3, b = packed["w1"], packed["w2"], packed["w3"], packed["b"]
    action_size, out_pad = packed["action_size"], packed["out_pad"]
    B, S = x.shape

    # Batch tile: as large as possible (up to tb rows) to amortize per-step overhead,
    # but split moderate batches into >=4 steps so the "parallel" batch axis actually
    # distributes work across both TensorCores on v7x. Rounded to 16 rows (bf16-safe).
    TB = min(tb, max(16, _round_up(-(-B // 4), 16)))
    Bp = _round_up(B, TB)
    if Bp != B:
        x = jnp.pad(x, ((0, Bp - B), (0, 0)))
    grid_b = Bp // TB

    # VMEM budget from actual sizes: double-buffered x/out tiles + (double-counted for
    # safety) resident weights + slack; capped at 40 MiB (headroom under v7x's 64 MiB).
    xi = jnp.dtype(x.dtype).itemsize
    tile_bytes = TB * S * xi + TB * out_pad * xi
    weight_bytes = sum(int(a.size) * a.dtype.itemsize for a in (w1, w2, w3, b))
    vmem_limit = int(min(2 * tile_bytes + 2 * weight_bytes + (4 << 20), 40 << 20))

    out = pl.pallas_call(
        _mlp_kernel,
        out_shape=jax.ShapeDtypeStruct((Bp, out_pad), jnp.float32),
        grid=(grid_b,),
        in_specs=[
            pl.BlockSpec((TB, S), lambda i: (i, 0)),     # streamed batch tile
            pl.BlockSpec(w1.shape, lambda i: (0, 0)),    # weights: VMEM-resident
            pl.BlockSpec(w2.shape, lambda i: (0, 0)),
            pl.BlockSpec(w3.shape, lambda i: (0, 0)),
            pl.BlockSpec(b.shape, lambda i: (0, 0)),     # packed biases (3, 128) f32
        ],
        out_specs=pl.BlockSpec((TB, out_pad), lambda i: (i, 0)),
        compiler_params=pltpu.CompilerParams(
            dimension_semantics=("parallel",),           # 2 TCs on v7x; no-op on v5e/v6e
            vmem_limit_bytes=vmem_limit,
        ),
    )(x, w1, w2, w3, b)
    return out[:B, :action_size]


def init_params(key, state_size, action_size):
    """Deterministic init mirroring nn.Linear's default U(-1/sqrt(fan_in), 1/sqrt(fan_in)).
    Weights are stored as (in_features, out_features)."""
    ks = jax.random.split(key, 6)

    def linear(kw, kb, fan_in, fan_out):
        bound = 1.0 / jnp.sqrt(fan_in)
        w = jax.random.uniform(kw, (fan_in, fan_out), jnp.float32, -bound, bound)
        b = jax.random.uniform(kb, (1, fan_out), jnp.float32, -bound, bound)
        return w, b

    w1, b1 = linear(ks[0], ks[1], state_size, HIDDEN)
    w2, b2 = linear(ks[2], ks[3], HIDDEN, HIDDEN)
    w3, b3 = linear(ks[4], ks[5], HIDDEN, action_size)
    return dict(w1=w1, b1=b1, w2=w2, b2=b2, w3=w3, b3=b3)


def mlp_reference(x, p):
    h1 = jnp.maximum(x @ p["w1"] + p["b1"], 0.0)
    h2 = jnp.maximum(h1 @ p["w2"] + p["b2"], 0.0)
    return h2 @ p["w3"] + p["b3"]


if __name__ == "__main__":
    state_size = 16
    action_size = 4

    key = jax.random.PRNGKey(0)
    k_x, k_x2, k_p = jax.random.split(key, 3)
    params = init_params(k_p, state_size, action_size)

    # --- exact f32 path: small batch (typical RL per-step usage), tight tolerance ---
    packed_f32 = pack_params(params, state_size, action_size, dtype=jnp.float32)
    x_small = jax.random.normal(k_x, (8, state_size), jnp.float32)
    out_small = jax.block_until_ready(mlp_forward(x_small, packed_f32))
    ref_small = mlp_reference(x_small, params)
    assert out_small.shape == (8, action_size), out_small.shape
    assert jnp.allclose(out_small, ref_small, atol=1e-4, rtol=1e-5), "mismatch (f32 small batch)"

    # --- bf16 MXU path (default packing): non-multiple-of-tile batch exercises the grid,
    #     padding, resident weights and multi-step batch streaming; looser tolerance ---
    packed_bf16 = pack_params(params, state_size, action_size)   # dtype=bf16 default
    x_big = jax.random.normal(k_x2, (400, state_size), jnp.float32)
    out_big = jax.block_until_ready(mlp_forward(x_big, packed_bf16))
    ref_big = mlp_reference(x_big, params)
    assert out_big.shape == (400, action_size), out_big.shape
    assert jnp.allclose(out_big, ref_big, atol=5e-2, rtol=5e-2), "mismatch (bf16 batch)"

    print("KERNEL_OK")
</pallas_src>

<mosaic_0001>
module attributes {stable_mosaic.version = 11 : i64} {
  func.func @_mlp_kernel(%arg0: i32, %arg1: memref<16x16xf32, #tpu.memory_space<vmem>>, %arg2: memref<16x128xf32, #tpu.memory_space<vmem>>, %arg3: memref<128x128xf32, #tpu.memory_space<vmem>>, %arg4: memref<128x8xf32, #tpu.memory_space<vmem>>, %arg5: memref<3x128xf32, #tpu.memory_space<vmem>>, %arg6: memref<16x8xf32, #tpu.memory_space<vmem>>) attributes {dimension_semantics = [#tpu.dimension_semantics<parallel>], iteration_bounds = array<i64: 1>, scalar_prefetch = 0 : i64, scratch_operands = 0 : i64, tpu.core_type = #tpu.core_type<tc>, window_params = [{transform_indices = @transform_0, window_bounds = array<i64: 16, 16>}, {pipeline_mode = #tpu.pipeline_mode<synchronous>, transform_indices = @transform_1, window_bounds = array<i64: 16, 128>}, {pipeline_mode = #tpu.pipeline_mode<synchronous>, transform_indices = @transform_2, window_bounds = array<i64: 128, 128>}, {pipeline_mode = #tpu.pipeline_mode<synchronous>, transform_indices = @transform_3, window_bounds = array<i64: 128, 8>}, {pipeline_mode = #tpu.pipeline_mode<synchronous>, transform_indices = @transform_4, window_bounds = array<i64: 3, 128>}, {transform_indices = @transform_5, window_bounds = array<i64: 16, 8>}]} {
    %c0 = arith.constant 0 : index
    %c0_0 = arith.constant 0 : index
    %0 = vector.load %arg1[%c0, %c0_0] : memref<16x16xf32, #tpu.memory_space<vmem>>, vector<16x16xf32>
    %c0_1 = arith.constant 0 : index
    %c0_2 = arith.constant 0 : index
    %1 = vector.load %arg2[%c0_1, %c0_2] : memref<16x128xf32, #tpu.memory_space<vmem>>, vector<16x128xf32>
    %cst = arith.constant dense<0.000000e+00> : vector<16x128xf32>
    %2 = tpu.matmul %0, %1, %cst {dimension_numbers = #tpu.dot_dimension_numbers<[1], [0], [0], [1], [0, 0, 1, 1], [], []>} : vector<16x16xf32>, vector<16x128xf32>, vector<16x128xf32> -> vector<16x128xf32>
    %c0_3 = arith.constant 0 : index
    %c0_4 = arith.constant 0 : index
    %3 = vector.load %arg5[%c0_3, %c0_4] : memref<3x128xf32, #tpu.memory_space<vmem>>, vector<1x128xf32>
    %4 = vector.broadcast %3 : vector<1x128xf32> to vector<16x128xf32>
    %5 = arith.addf %2, %4 : vector<16x128xf32>
    %cst_5 = arith.constant 0.000000e+00 : f32
    %6 = vector.broadcast %cst_5 : f32 to vector<16x128xf32>
    %7 = arith.maximumf %5, %6 : vector<16x128xf32>
    %c0_6 = arith.constant 0 : index
    %c0_7 = arith.constant 0 : index
    %8 = vector.load %arg3[%c0_6, %c0_7] : memref<128x128xf32, #tpu.memory_space<vmem>>, vector<128x128xf32>
    %cst_8 = arith.constant dense<0.000000e+00> : vector<16x128xf32>
    %9 = tpu.matmul %7, %8, %cst_8 {dimension_numbers = #tpu.dot_dimension_numbers<[1], [0], [0], [1], [0, 0, 1, 1], [], []>} : vector<16x128xf32>, vector<128x128xf32>, vector<16x128xf32> -> vector<16x128xf32>
    %c1 = arith.constant 1 : index
    %c0_9 = arith.constant 0 : index
    %10 = vector.load %arg5[%c1, %c0_9] : memref<3x128xf32, #tpu.memory_space<vmem>>, vector<1x128xf32>
    %11 = vector.broadcast %10 : vector<1x128xf32> to vector<16x128xf32>
    %12 = arith.addf %9, %11 : vector<16x128xf32>
    %cst_10 = arith.constant 0.000000e+00 : f32
    %13 = vector.broadcast %cst_10 : f32 to vector<16x128xf32>
    %14 = arith.maximumf %12, %13 : vector<16x128xf32>
    %c0_11 = arith.constant 0 : index
    %c0_12 = arith.constant 0 : index
    %15 = vector.load %arg4[%c0_11, %c0_12] : memref<128x8xf32, #tpu.memory_space<vmem>>, vector<128x8xf32>
    %cst_13 = arith.constant dense<0.000000e+00> : vector<16x8xf32>
    %16 = tpu.matmul %14, %15, %cst_13 {dimension_numbers = #tpu.dot_dimension_numbers<[1], [0], [0], [1], [0, 0, 1, 1], [], []>} : vector<16x128xf32>, vector<128x8xf32>, vector<16x8xf32> -> vector<16x8xf32>
    %c2 = arith.constant 2 : index
    %c0_14 = arith.constant 0 : index
    %17 = vector.load %arg5[%c2, %c0_14] : memref<3x128xf32, #tpu.memory_space<vmem>>, vector<1x8xf32>
    %18 = vector.broadcast %17 : vector<1x8xf32> to vector<16x8xf32>
    %19 = arith.addf %16, %18 : vector<16x8xf32>
    %c0_15 = arith.constant 0 : index
    %c0_16 = arith.constant 0 : index
    %20 = vector.load %arg6[%c0_15, %c0_16] : memref<16x8xf32, #tpu.memory_space<vmem>>, vector<16x8xf32>
    tpu.vector_store %arg6[%c0_15, %c0_16], %19 {strides = array<i32>} : memref<16x8xf32, #tpu.memory_space<vmem>>, vector<16x8xf32>,
    return
  }
  func.func @transform_0(%arg0: i32) -> (i32, i32) {
    %c0_i32 = arith.constant 0 : i32
    %c0_i32_0 = arith.constant 0 : i32
    return %arg0, %c0_i32 : i32, i32
  }
  func.func @transform_1(%arg0: i32) -> (i32, i32) {
    %c0_i32 = arith.constant 0 : i32
    %c0_i32_0 = arith.constant 0 : i32
    %c0_i32_1 = arith.constant 0 : i32
    return %c0_i32, %c0_i32_0 : i32, i32
  }
  func.func @transform_2(%arg0: i32) -> (i32, i32) {
    %c0_i32 = arith.constant 0 : i32
    %c0_i32_0 = arith.constant 0 : i32
    %c0_i32_1 = arith.constant 0 : i32
    return %c0_i32, %c0_i32_0 : i32, i32
  }
  func.func @transform_3(%arg0: i32) -> (i32, i32) {
    %c0_i32 = arith.constant 0 : i32
    %c0_i32_0 = arith.constant 0 : i32
    %c0_i32_1 = arith.constant 0 : i32
    return %c0_i32, %c0_i32_0 : i32, i32
  }
  func.func @transform_4(%arg0: i32) -> (i32, i32) {
    %c0_i32 = arith.constant 0 : i32
    %c0_i32_0 = arith.constant 0 : i32
    %c0_i32_1 = arith.constant 0 : i32
    return %c0_i32, %c0_i32_0 : i32, i32
  }
  func.func @transform_5(%arg0: i32) -> (i32, i32) {
    %c0_i32 = arith.constant 0 : i32
    %c0_i32_0 = arith.constant 0 : i32
    return %arg0, %c0_i32 : i32, i32
  }
}

</mosaic_0001>

<llo_original>
// kernel: tpu_custom_call.1
$region0: #{tpu_custom_call.1}
  #allocation0 [shape = 'u32[]', space=smem, size = 0x4, offset = 0x4, fixed_abs, tag = 'smem constant byte address 0x4 - core index']
  #allocation1 [shape = 'u32[72,128]{1,0:T(1,128)}', space=vmem, size = 0x9000, scoped, tag = 'internal scratch']
  %s0 = inlined_call_operand.hbm [shape: f32[16,16], index: 0, kind: input, shape index: {}]
  %s1 = inlined_call_operand.hbm [shape: f32[16,128], index: 1, kind: input, shape index: {}]
  %s2 = inlined_call_operand.vmem [shape: f32[128,128], index: 2, kind: input, shape index: {}]
  %s3 = inlined_call_operand.vmem [shape: f32[128,8], index: 3, kind: input, shape index: {}]
  %s4 = inlined_call_operand.vmem [shape: f32[3,128], index: 4, kind: input, shape index: {}]
  %s5 = inlined_call_operand.vmem [shape: f32[16,8], index: 5, kind: output, shape index: {}]
  %s6 = sld [smem:[#allocation0]]
  $region38: #{tpu_custom_call.1} parent=0
    _
  %s8 = ssub.s32 1, %s6
  %s9 = scalar_select 0, %s8, %s6
  $region1: #{tpu_custom_call.1} parent=0
    #allocation2 [shape = 'u8[8192]{0}', space=vmem, size = 0x2000, scoped, tag = 'input window, operand 0, single buffered']
    #allocation3 [shape = 's32[1]{0}', space=sflag, size = 0x4, scoped, tag = 'scoped memory for tpu_custom_call.1']
    #allocation4 [shape = 'u8[8192]{0}', space=vmem, size = 0x2000, scoped, tag = 'input window, operand 1, single buffered']
    #allocation5 [shape = 's32[1]{0}', space=sflag, size = 0x4, scoped, tag = 'scoped memory for tpu_custom_call.1']
    %10 = vsyncpa [#allocation3], 0
    %11 = vsyncpa [#allocation5], 0
    // Predicated region
    $region2: #{tpu_custom_call.1} parent=1 // pred_check
      _
    $region3: #{tpu_custom_call.1} parent=1 // pred_check_branch
      %13 = sbr.rel (0) target = $region5
    $region4: #{tpu_custom_call.1} parent=1 // pred_region
      %15 = vsyncadd [#allocation3], 0
      %s16 = sshll.u32 %s0, 4
      %s17 = int_to_ptr.hbm [resolvable:$true] %s16
      %s18 = sshll.u32 [#allocation2], 4
      %s19 = int_to_ptr.vmem [resolvable:$true] %s18
      %24 = dma.hbm_to_vmem [thread:$0]  %s17, 256, %s19, [#allocation3], 128, 128, 8
    $region5: #{tpu_custom_call.1} parent=1 // pred_fallthru
      _
    // Predicated region
    $region6: #{tpu_custom_call.1} parent=1 // pred_check
      _
    $region7: #{tpu_custom_call.1} parent=1 // pred_check_branch
      %26 = sbr.rel (0) target = $region9
    $region8: #{tpu_custom_call.1} parent=1 // pred_region
      %28 = vsyncadd [#allocation5], 0
      %s29 = sshll.u32 %s1, 4
      %s30 = int_to_ptr.hbm [resolvable:$true] %s29
      %s31 = sshll.u32 [#allocation4], 4
      %s32 = int_to_ptr.vmem [resolvable:$true] %s31
      %37 = dma.hbm_to_vmem [thread:$0]  %s30, 256, %s32, [#allocation5], 128, 128, 8
    $region9: #{tpu_custom_call.1} parent=1 // pred_fallthru
      _
    // Predicated region
    $region10: #{tpu_custom_call.1} parent=1 // pred_check
      _
    $region11: #{tpu_custom_call.1} parent=1 // pred_check_branch
      %39 = sbr.rel (0) target = $region13
    $region12: #{tpu_custom_call.1} parent=1 // pred_region
      _
    $region13: #{tpu_custom_call.1} parent=1 // pred_fallthru
      _
    // Predicated region
    $region14: #{tpu_custom_call.1} parent=1 // pred_check
      _
    $region15: #{tpu_custom_call.1} parent=1 // pred_check_branch
      %41 = sbr.rel (0) target = $region17
    $region16: #{tpu_custom_call.1} parent=1 // pred_region
      _
    $region17: #{tpu_custom_call.1} parent=1 // pred_fallthru
      _
    // Predicated region
    $region18: #{tpu_custom_call.1} parent=1 // pred_check
      _
    $region19: #{tpu_custom_call.1} parent=1 // pred_check_branch
      %43 = sbr.rel (0) target = $region21
    $region20: #{tpu_custom_call.1} parent=1 // pred_region
      _
    $region21: #{tpu_custom_call.1} parent=1 // pred_fallthru
      _
    // Predicated region
    $region22: #{tpu_custom_call.1} parent=1 // pred_check
      _
    $region23: #{tpu_custom_call.1} parent=1 // pred_check_branch
      %45 = sbr.rel (0) target = $region25
    $region24: #{tpu_custom_call.1} parent=1 // pred_region
      %47 = dma.done [#allocation3], 256
    $region25: #{tpu_custom_call.1} parent=1 // pred_fallthru
      _
    // Predicated region
    $region26: #{tpu_custom_call.1} parent=1 // pred_check
      _
    $region27: #{tpu_custom_call.1} parent=1 // pred_check_branch
      %49 = sbr.rel (0) target = $region29
    $region28: #{tpu_custom_call.1} parent=1 // pred_region
      %51 = dma.done [#allocation5], 256
    $region29: #{tpu_custom_call.1} parent=1 // pred_fallthru
      _
    %v52 = vld [vmem:[#allocation2] sm:$0xff]
    %v53 = vld [vmem:[#allocation2 + $0x8] sm:$0xff]
    %v54 = vld [vmem:[#allocation4] sm:$0xff]
    %v55 = vld [vmem:[#allocation4 + $0x8] sm:$0xff]
    %v56 = vld [vmem:[%s4] sm:$0x1]
    %v57 = vperm.slane %v56, 0
    %vm58 = vcmask 130048
    %v60 = vsel %vm58, %v52, 0
    %v63 = vsel %vm58, %v53, 0
    %65 = vmatpush.msra.mxu0 0.0
    %66 = vmatpush.msra.mxu0 0.0
    %67 = vmatpush.msra.mxu0 0.0
    %68 = vmatpush.msra.mxu0 0.0
    %69 = vmatpush.msra.mxu0 0.0
    %70 = vmatpush.msra.mxu0 0.0
    %71 = vmatpush.msra.mxu0 0.0
    %72 = vmatpush.msra.mxu0 0.0
    %73 = vmatpush.msra.mxu0 0.0
    %74 = vmatpush.msra.mxu0 0.0
    %75 = vmatpush.msra.mxu0 0.0
    %76 = vmatpush.msra.mxu0 0.0
    %77 = vmatpush.msra.mxu0 0.0
    %78 = vmatpush.msra.mxu0 0.0
    %79 = vmatpush.msra.mxu0 %v55
    %80 = vmatpush.msra.mxu0 %v54
    %81 = vmatmul.f32.gmra.mxu0 %v60
    %v82 = vpop.f32.mrf.mxu0
    %v83 = vadd.f32 %v57, %v82
    %84 = vmatmul.f32.gmra.mxu0 %v63
    %v85 = vpop.f32.mrf.mxu0
    %v86 = vadd.f32 %v57, %v85
    %87 = vdwg.mxu0
    %v88 = vmax.f32 %v83, 0.0
    %v89 = vmax.f32 %v86, 0.0
    %v90 = vld [vmem:[%s2] sm:$0xff]
    %v91 = vld [vmem:[%s2 + $0x8] sm:$0xff]
    %v92 = vld [vmem:[%s2 + $0x10] sm:$0xff]
    %v93 = vld [vmem:[%s2 + $0x18] sm:$0xff]
    %v94 = vld [vmem:[%s2 + $0x20] sm:$0xff]
    %v95 = vld [vmem:[%s2 + $0x28] sm:$0xff]
    %v96 = vld [vmem:[%s2 + $0x30] sm:$0xff]
    %v97 = vld [vmem:[%s2 + $0x38] sm:$0xff]
    %v98 = vld [vmem:[%s2 + $0x40] sm:$0xff]
    %v99 = vld [vmem:[%s2 + $0x48] sm:$0xff]
    %v100 = vld [vmem:[%s2 + $0x50] sm:$0xff]
    %v101 = vld [vmem:[%s2 + $0x58] sm:$0xff]
    %v102 = vld [vmem:[%s2 + $0x60] sm:$0xff]
    %v103 = vld [vmem:[%s2 + $0x68] sm:$0xff]
    %v104 = vld [vmem:[%s2 + $0x70] sm:$0xff]
    %v105 = vld [vmem:[%s2 + $0x78] sm:$0xff]
    %v106 = vld [vmem:[%s4 + $0x1] sm:$0x1]
    %v107 = vperm.slane %v106, 0
    %108 = vmatpush.msra.mxu0 %v105
    %109 = vmatpush.msra.mxu0 %v104
    %110 = vmatpush.msra.mxu0 %v103
    %111 = vmatpush.msra.mxu0 %v102
    %112 = vmatpush.msra.mxu0 %v101
    %113 = vmatpush.msra.mxu0 %v100
    %114 = vmatpush.msra.mxu0 %v99
    %115 = vmatpush.msra.mxu0 %v98
    %116 = vmatpush.msra.mxu0 %v97
    %117 = vmatpush.msra.mxu0 %v96
    %118 = vmatpush.msra.mxu0 %v95
    %119 = vmatpush.msra.mxu0 %v94
    %120 = vmatpush.msra.mxu0 %v93
    %121 = vmatpush.msra.mxu0 %v92
    %122 = vmatpush.msra.mxu0 %v91
    %123 = vmatpush.msra.mxu0 %v90
    %124 = vmatmul.f32.gmra.mxu0 %v88
    %v125 = vpop.f32.mrf.mxu0
    %v126 = vadd.f32 %v107, %v125
    %127 = vmatmul.f32.gmra.mxu0 %v89
    %v128 = vpop.f32.mrf.mxu0
    %v129 = vadd.f32 %v107, %v128
    %130 = vdwg.mxu0
    %v131 = vmax.f32 %v126, 0.0
    %v132 = vmax.f32 %v129, 0.0
    %v133 = vld [vmem:[%s3] sm:$0xff]
    %v134 = vld [vmem:[%s3 + $0x8] sm:$0xff]
    %v135 = vld [vmem:[%s3 + $0x10] sm:$0xff]
    %v136 = vld [vmem:[%s3 + $0x18] sm:$0xff]
    %v137 = vld [vmem:[%s3 + $0x20] sm:$0xff]
    %v138 = vld [vmem:[%s3 + $0x28] sm:$0xff]
    %v139 = vld [vmem:[%s3 + $0x30] sm:$0xff]
    %v140 = vld [vmem:[%s3 + $0x38] sm:$0xff]
    %v141 = vld [vmem:[%s3 + $0x40] sm:$0xff]
    %v142 = vld [vmem:[%s3 + $0x48] sm:$0xff]
    %v143 = vld [vmem:[%s3 + $0x50] sm:$0xff]
    %v144 = vld [vmem:[%s3 + $0x58] sm:$0xff]
    %v145 = vld [vmem:[%s3 + $0x60] sm:$0xff]
    %v146 = vld [vmem:[%s3 + $0x68] sm:$0xff]
    %v147 = vld [vmem:[%s3 + $0x70] sm:$0xff]
    %v148 = vld [vmem:[%s3 + $0x78] sm:$0xff]
    %v149 = vld [vmem:[%s4 + $0x2] sm:$0x1]
    %v150 = vperm.slane %v149, 0
    %151 = vmatpush.msra.mxu0 %v148
    %152 = vmatpush.msra.mxu0 %v147
    %153 = vmatpush.msra.mxu0 %v146
    %154 = vmatpush.msra.mxu0 %v145
    %155 = vmatpush.msra.mxu0 %v144
    %156 = vmatpush.msra.mxu0 %v143
    %157 = vmatpush.msra.mxu0 %v142
    %158 = vmatpush.msra.mxu0 %v141
    %159 = vmatpush.msra.mxu0 %v140
    %160 = vmatpush.msra.mxu0 %v139
    %161 = vmatpush.msra.mxu0 %v138
    %162 = vmatpush.msra.mxu0 %v137
    %163 = vmatpush.msra.mxu0 %v136
    %164 = vmatpush.msra.mxu0 %v135
    %165 = vmatpush.msra.mxu0 %v134
    %166 = vmatpush.msra.mxu0 %v133
    %167 = vmatmul.f32.gmra.mxu0 %v131
    %v168 = vpop.f32.mrf.mxu0
    %v169 = vadd.f32 %v150, %v168
    %170 = vmatmul.f32.gmra.mxu0 %v132
    %v171 = vpop.f32.mrf.mxu0
    %v172 = vadd.f32 %v150, %v171
    %173 = vdwg.mxu0
    %vm174 = vcmask 64512
    %175 = vst.msk [vmem:[%s5] sm:$0xff] %vm174, %v169
    %176 = vst.msk [vmem:[%s5 + $0x8] sm:$0xff] %vm174, %v172
    // Predicated region
    $region30: #{tpu_custom_call.1} parent=1 // pred_check
      _
    $region31: #{tpu_custom_call.1} parent=1 // pred_check_branch
      %178 = sbr.rel (0) target = $region33
    $region32: #{tpu_custom_call.1} parent=1 // pred_region
      _
    $region33: #{tpu_custom_call.1} parent=1 // pred_fallthru
      _
    // Predicated region
    $region34: #{tpu_custom_call.1} parent=1 // pred_check
      _
    $region35: #{tpu_custom_call.1} parent=1 // pred_check_branch
      %180 = sbr.rel (0) target = $region37
    $region36: #{tpu_custom_call.1} parent=1 // pred_region
      _
    $region37: #{tpu_custom_call.1} parent=1 // pred_fallthru
      _
    %181 = vsyncpa [#allocation3], 1
    %182 = vsyncpa [#allocation5], 1

</llo_original>
